<compile_context>
chip_gen: v7x
topology: tpu7x:2x2x1
jax: 0.10.0
libtpu: 0.0.40
codegen_flags: <defaults>
</compile_context>

<pallas_src>
import functools

import jax
import jax.numpy as jnp
from jax.experimental import pallas as pl
from jax.experimental.pallas import tpu as pltpu


def _round_up(x, m):
    return ((x + m - 1) // m) * m


def _mlp_kernel(z_ref, w_in_ref, b_in_ref, ws_ref, bs_ref, w_out_ref, b_out_ref,
                o_ref, *, num_hidden_layers):
    # linear_in + relu   (W_in already transposed to (Hc, Hh_pad))
    h = jnp.dot(z_ref[...], w_in_ref[...],
                preferred_element_type=jnp.float32) + b_in_ref[...]
    h = jnp.maximum(h, 0.0)

    # hidden linears + relu.  Load the stacked biases once; slice statically
    # inside the statically-unrolled loop (no per-iteration dynamic loads).
    bs_all = bs_ref[...]
    for i in range(num_hidden_layers - 1):
        h = jnp.dot(h, ws_ref[i],
                    preferred_element_type=jnp.float32) + bs_all[i:i + 1, :]
        h = jnp.maximum(h, 0.0)

    # linear_out + tanh  (W_out already transposed to (Hh_pad, out_dim_pad))
    out = jnp.dot(h, w_out_ref[...],
                  preferred_element_type=jnp.float32) + b_out_ref[...]
    o_ref[...] = jnp.tanh(out).astype(o_ref.dtype)


def _build_call(*, B_pad, tb, Hc, Hh_pad, out_pad, L):
    nW = max(L - 1, 1)
    kernel = functools.partial(_mlp_kernel, num_hidden_layers=L)
    flops = 2 * B_pad * (Hc * Hh_pad + (L - 1) * Hh_pad * Hh_pad + Hh_pad * out_pad)
    weight_bytes = 4 * (Hc * Hh_pad + Hh_pad + nW * (Hh_pad * Hh_pad + Hh_pad)
                        + Hh_pad * out_pad + out_pad)
    cost = pl.CostEstimate(
        flops=flops,
        transcendentals=B_pad * out_pad,
        bytes_accessed=B_pad * (Hc + out_pad) * 4 + weight_bytes,
    )
    return pl.pallas_call(
        kernel,
        out_shape=jax.ShapeDtypeStruct((B_pad, out_pad), jnp.float32),
        grid_spec=pltpu.PrefetchScalarGridSpec(
            num_scalar_prefetch=0,
            grid=(B_pad // tb,),
            in_specs=[
                pl.BlockSpec((tb, Hc), lambda i: (i, 0)),                   # z tile
                pl.BlockSpec((Hc, Hh_pad), lambda i: (0, 0)),               # W_in^T
                pl.BlockSpec((1, Hh_pad), lambda i: (0, 0)),                # b_in
                pl.BlockSpec((nW, Hh_pad, Hh_pad), lambda i: (0, 0, 0)),    # hidden W^T (stacked)
                pl.BlockSpec((nW, Hh_pad), lambda i: (0, 0)),               # hidden b (stacked)
                pl.BlockSpec((Hh_pad, out_pad), lambda i: (0, 0)),          # W_out^T
                pl.BlockSpec((1, out_pad), lambda i: (0, 0)),               # b_out
            ],
            out_specs=pl.BlockSpec((tb, out_pad), lambda i: (i, 0)),        # lane-dense
        ),
        compiler_params=pltpu.CompilerParams(
            dimension_semantics=("parallel",)),
        cost_estimate=cost,
    )


def _choose_tile(B, tb):
    """Clamp for tiny inputs; keep >= 2 grid steps for megacore when B is big."""
    tb_eff = _round_up(max(8, min(tb, B)), 8)
    # v7x has 2 TensorCores sharded via the single 'parallel' grid axis: avoid
    # collapsing the grid to a single step when there's enough work to split.
    if B > 1024 and _round_up(B, tb_eff) // tb_eff < 2:
        tb_eff = _round_up((B + 1) // 2, 8)
    return tb_eff


def final_tanh_f(z, params, *, input_channels, hidden_channels,
                 hidden_hidden_channels, num_hidden_layers, tb=2048):
    """Pallas implementation of FinalTanh_f.forward.

    z: (..., hidden_channels) float32
    returns: (..., hidden_channels, input_channels) float32
    """
    w_in, b_in, ws, bs, w_out, b_out = params  # PyTorch (out, in) weight layout
    Hc, Hh = hidden_channels, hidden_hidden_channels
    Ic, L = input_channels, num_hidden_layers
    out_dim = Ic * Hc
    nW = max(L - 1, 1)

    # Pad hidden and output widths to lane-dense multiples of 128.  Zero
    # padding is exact: padded hidden lanes stay 0 through ReLU, padded
    # W_out^T rows multiply zero activations, padded output columns give
    # tanh(0)=0 and are sliced off below.
    Hh_pad = _round_up(Hh, 128)
    out_pad = _round_up(out_dim, 128)

    # One-time weight transposes + zero-padding OUTSIDE the kernel (weights are
    # tiny, so this is free and removes per-grid-step cross-lane work inside).
    w_in_t = jnp.zeros((Hc, Hh_pad), jnp.float32).at[:, :Hh].set(jnp.asarray(w_in).T)
    b_in_p = jnp.zeros((1, Hh_pad), jnp.float32).at[:, :Hh].set(jnp.asarray(b_in).reshape(1, Hh))
    ws_t = jnp.zeros((nW, Hh_pad, Hh_pad), jnp.float32).at[:, :Hh, :Hh].set(
        jnp.swapaxes(jnp.asarray(ws), -1, -2))
    bs_p = jnp.zeros((nW, Hh_pad), jnp.float32).at[:, :Hh].set(jnp.asarray(bs))
    w_out_t = jnp.zeros((Hh_pad, out_pad), jnp.float32).at[:Hh, :out_dim].set(
        jnp.asarray(w_out).T)
    b_out_p = jnp.zeros((1, out_pad), jnp.float32).at[:, :out_dim].set(
        jnp.asarray(b_out).reshape(1, out_dim))

    lead_shape = z.shape[:-1]
    B = 1
    for d in lead_shape:
        B *= d
    z2 = z.reshape(B, Hc).astype(jnp.float32)

    # Tile the flattened batch; pad the tail instead of asserting divisibility.
    tb_eff = _choose_tile(B, tb)
    B_pad = _round_up(B, tb_eff)
    if B_pad != B:
        z2 = jnp.pad(z2, ((0, B_pad - B), (0, 0)))

    call = _build_call(B_pad=B_pad, tb=tb_eff, Hc=Hc, Hh_pad=Hh_pad,
                       out_pad=out_pad, L=L)
    out_flat = call(z2, w_in_t, b_in_p, ws_t, bs_p, w_out_t, b_out_p)

    return out_flat[:B, :out_dim].reshape(*lead_shape, Hc, Ic)


def init_params(key, input_channels, hidden_channels, hidden_hidden_channels,
                num_hidden_layers):
    """Deterministic synthetic init (PyTorch nn.Linear weight layout: (out, in))."""
    Hc, Hh = hidden_channels, hidden_hidden_channels
    out_dim = input_channels * hidden_channels
    ks = jax.random.split(key, 6)
    w_in = jax.random.normal(ks[0], (Hh, Hc), jnp.float32) * 0.2
    b_in = jax.random.normal(ks[1], (1, Hh), jnp.float32) * 0.1
    n_hidden = max(num_hidden_layers - 1, 1)
    ws = jax.random.normal(ks[2], (n_hidden, Hh, Hh), jnp.float32) * 0.2
    bs = jax.random.normal(ks[3], (n_hidden, Hh), jnp.float32) * 0.1
    w_out = jax.random.normal(ks[4], (out_dim, Hh), jnp.float32) * 0.2
    b_out = jax.random.normal(ks[5], (1, out_dim), jnp.float32) * 0.1
    return w_in, b_in, ws, bs, w_out, b_out


def reference(z, params, input_channels, hidden_channels, num_hidden_layers):
    w_in, b_in, ws, bs, w_out, b_out = params
    h = jnp.maximum(z @ w_in.T + b_in[0], 0.0)
    for i in range(num_hidden_layers - 1):
        h = jnp.maximum(h @ ws[i].T + bs[i], 0.0)
    o = jnp.tanh(h @ w_out.T + b_out[0])
    return o.reshape(*z.shape[:-1], hidden_channels, input_channels)


if __name__ == "__main__":
    input_channels = 4
    hidden_channels = 32
    hidden_hidden_channels = 64
    num_hidden_layers = 3

    key = jax.random.PRNGKey(0)
    kz, kp, kz2, kz3 = jax.random.split(key, 4)
    params = init_params(kp, input_channels, hidden_channels,
                         hidden_hidden_channels, num_hidden_layers)
    kw = dict(input_channels=input_channels,
              hidden_channels=hidden_channels,
              hidden_hidden_channels=hidden_hidden_channels,
              num_hidden_layers=num_hidden_layers)

    # Primary example: (batch=2, seq=8, hidden=32) -> flattened batch 16.
    z = jax.random.normal(kz, (2, 8, hidden_channels), jnp.float32)
    out = jax.block_until_ready(final_tanh_f(z, params, **kw))
    ref = reference(z, params, input_channels, hidden_channels, num_hidden_layers)
    assert out.shape == (2, 8, hidden_channels, input_channels), out.shape
    assert jnp.allclose(out, ref, atol=1e-5, rtol=1e-5), "mismatch vs JAX reference"

    # Tail-padding path: flattened batch 3*7 = 21 (not a multiple of 8).
    z_odd = jax.random.normal(kz2, (3, 7, hidden_channels), jnp.float32)
    out_odd = jax.block_until_ready(final_tanh_f(z_odd, params, **kw))
    ref_odd = reference(z_odd, params, input_channels, hidden_channels,
                        num_hidden_layers)
    assert out_odd.shape == (3, 7, hidden_channels, input_channels), out_odd.shape
    assert jnp.allclose(out_odd, ref_odd, atol=1e-5, rtol=1e-5), "mismatch (padded path)"

    # Multi-grid-step path (tb override exercises tiling without huge arrays).
    z_big = jax.random.normal(kz3, (4, 64, hidden_channels), jnp.float32)  # B=256
    out_big = jax.block_until_ready(final_tanh_f(z_big, params, tb=64, **kw))
    ref_big = reference(z_big, params, input_channels, hidden_channels,
                        num_hidden_layers)
    assert out_big.shape == (4, 64, hidden_channels, input_channels), out_big.shape
    assert jnp.allclose(out_big, ref_big, atol=1e-5, rtol=1e-5), "mismatch (tiled path)"

    print("KERNEL_OK")
</pallas_src>

<mosaic_0001>
module attributes {stable_mosaic.version = 11 : i64} {
  func.func @_mlp_kernel(%arg0: i32, %arg1: memref<16x32xf32, #tpu.memory_space<vmem>>, %arg2: memref<32x128xf32, #tpu.memory_space<vmem>>, %arg3: memref<1x128xf32, #tpu.memory_space<vmem>>, %arg4: memref<2x128x128xf32, #tpu.memory_space<vmem>>, %arg5: memref<2x128xf32, #tpu.memory_space<vmem>>, %arg6: memref<128x128xf32, #tpu.memory_space<vmem>>, %arg7: memref<1x128xf32, #tpu.memory_space<vmem>>, %arg8: memref<16x128xf32, #tpu.memory_space<vmem>>) attributes {dimension_semantics = [#tpu.dimension_semantics<parallel>], iteration_bounds = array<i64: 1>, scalar_prefetch = 0 : i64, scratch_operands = 0 : i64, tpu.core_type = #tpu.core_type<tc>, window_params = [{transform_indices = @transform_0, window_bounds = array<i64: 16, 32>}, {pipeline_mode = #tpu.pipeline_mode<synchronous>, transform_indices = @transform_1, window_bounds = array<i64: 32, 128>}, {pipeline_mode = #tpu.pipeline_mode<synchronous>, transform_indices = @transform_2, window_bounds = array<i64: 1, 128>}, {pipeline_mode = #tpu.pipeline_mode<synchronous>, transform_indices = @transform_3, window_bounds = array<i64: 2, 128, 128>}, {pipeline_mode = #tpu.pipeline_mode<synchronous>, transform_indices = @transform_4, window_bounds = array<i64: 2, 128>}, {pipeline_mode = #tpu.pipeline_mode<synchronous>, transform_indices = @transform_5, window_bounds = array<i64: 128, 128>}, {pipeline_mode = #tpu.pipeline_mode<synchronous>, transform_indices = @transform_6, window_bounds = array<i64: 1, 128>}, {transform_indices = @transform_7, window_bounds = array<i64: 16, 128>}]} {
    %c0 = arith.constant 0 : index
    %c0_0 = arith.constant 0 : index
    %0 = vector.load %arg1[%c0, %c0_0] : memref<16x32xf32, #tpu.memory_space<vmem>>, vector<16x32xf32>
    %c0_1 = arith.constant 0 : index
    %c0_2 = arith.constant 0 : index
    %1 = vector.load %arg2[%c0_1, %c0_2] : memref<32x128xf32, #tpu.memory_space<vmem>>, vector<32x128xf32>
    %cst = arith.constant dense<0.000000e+00> : vector<16x128xf32>
    %2 = tpu.matmul %0, %1, %cst {dimension_numbers = #tpu.dot_dimension_numbers<[1], [0], [0], [1], [0, 0, 1, 1], [], []>} : vector<16x32xf32>, vector<32x128xf32>, vector<16x128xf32> -> vector<16x128xf32>
    %c0_3 = arith.constant 0 : index
    %c0_4 = arith.constant 0 : index
    %3 = vector.load %arg3[%c0_3, %c0_4] : memref<1x128xf32, #tpu.memory_space<vmem>>, vector<1x128xf32>
    %4 = vector.broadcast %3 : vector<1x128xf32> to vector<16x128xf32>
    %5 = arith.addf %2, %4 : vector<16x128xf32>
    %cst_5 = arith.constant 0.000000e+00 : f32
    %6 = vector.broadcast %cst_5 : f32 to vector<16x128xf32>
    %7 = arith.maximumf %5, %6 : vector<16x128xf32>
    %c0_6 = arith.constant 0 : index
    %c0_7 = arith.constant 0 : index
    %8 = vector.load %arg5[%c0_6, %c0_7] : memref<2x128xf32, #tpu.memory_space<vmem>>, vector<2x128xf32>
    %c0_8 = arith.constant 0 : index
    %c0_9 = arith.constant 0 : index
    %c0_10 = arith.constant 0 : index
    %9 = vector.load %arg4[%c0_8, %c0_9, %c0_10] : memref<2x128x128xf32, #tpu.memory_space<vmem>>, vector<1x128x128xf32>
    %10 = vector.shape_cast %9 : vector<1x128x128xf32> to vector<128x128xf32>
    %cst_11 = arith.constant dense<0.000000e+00> : vector<16x128xf32>
    %11 = tpu.matmul %7, %10, %cst_11 {dimension_numbers = #tpu.dot_dimension_numbers<[1], [0], [0], [1], [0, 0, 1, 1], [], []>} : vector<16x128xf32>, vector<128x128xf32>, vector<16x128xf32> -> vector<16x128xf32>
    %12 = vector.extract_strided_slice %8 {offsets = [0, 0], sizes = [1, 128], strides = [1, 1]} : vector<2x128xf32> to vector<1x128xf32>
    %13 = vector.broadcast %12 : vector<1x128xf32> to vector<16x128xf32>
    %14 = arith.addf %11, %13 : vector<16x128xf32>
    %cst_12 = arith.constant 0.000000e+00 : f32
    %15 = vector.broadcast %cst_12 : f32 to vector<16x128xf32>
    %16 = arith.maximumf %14, %15 : vector<16x128xf32>
    %c1 = arith.constant 1 : index
    %c0_13 = arith.constant 0 : index
    %c0_14 = arith.constant 0 : index
    %17 = vector.load %arg4[%c1, %c0_13, %c0_14] : memref<2x128x128xf32, #tpu.memory_space<vmem>>, vector<1x128x128xf32>
    %18 = vector.shape_cast %17 : vector<1x128x128xf32> to vector<128x128xf32>
    %cst_15 = arith.constant dense<0.000000e+00> : vector<16x128xf32>
    %19 = tpu.matmul %16, %18, %cst_15 {dimension_numbers = #tpu.dot_dimension_numbers<[1], [0], [0], [1], [0, 0, 1, 1], [], []>} : vector<16x128xf32>, vector<128x128xf32>, vector<16x128xf32> -> vector<16x128xf32>
    %20 = vector.extract_strided_slice %8 {offsets = [1, 0], sizes = [1, 128], strides = [1, 1]} : vector<2x128xf32> to vector<1x128xf32>
    %21 = vector.broadcast %20 : vector<1x128xf32> to vector<16x128xf32>
    %22 = arith.addf %19, %21 : vector<16x128xf32>
    %cst_16 = arith.constant 0.000000e+00 : f32
    %23 = vector.broadcast %cst_16 : f32 to vector<16x128xf32>
    %24 = arith.maximumf %22, %23 : vector<16x128xf32>
    %c0_17 = arith.constant 0 : index
    %c0_18 = arith.constant 0 : index
    %25 = vector.load %arg6[%c0_17, %c0_18] : memref<128x128xf32, #tpu.memory_space<vmem>>, vector<128x128xf32>
    %cst_19 = arith.constant dense<0.000000e+00> : vector<16x128xf32>
    %26 = tpu.matmul %24, %25, %cst_19 {dimension_numbers = #tpu.dot_dimension_numbers<[1], [0], [0], [1], [0, 0, 1, 1], [], []>} : vector<16x128xf32>, vector<128x128xf32>, vector<16x128xf32> -> vector<16x128xf32>
    %c0_20 = arith.constant 0 : index
    %c0_21 = arith.constant 0 : index
    %27 = vector.load %arg7[%c0_20, %c0_21] : memref<1x128xf32, #tpu.memory_space<vmem>>, vector<1x128xf32>
    %28 = vector.broadcast %27 : vector<1x128xf32> to vector<16x128xf32>
    %29 = arith.addf %26, %28 : vector<16x128xf32>
    %30 = math.tanh %29 : vector<16x128xf32>
    %c0_22 = arith.constant 0 : index
    %c0_23 = arith.constant 0 : index
    %31 = vector.load %arg8[%c0_22, %c0_23] : memref<16x128xf32, #tpu.memory_space<vmem>>, vector<16x128xf32>
    tpu.vector_store %arg8[%c0_22, %c0_23], %30 {strides = array<i32>} : memref<16x128xf32, #tpu.memory_space<vmem>>, vector<16x128xf32>,
    return
  }
  func.func @transform_0(%arg0: i32) -> (i32, i32) {
    %c0_i32 = arith.constant 0 : i32
    %c0_i32_0 = arith.constant 0 : i32
    return %arg0, %c0_i32 : i32, i32
  }
  func.func @transform_1(%arg0: i32) -> (i32, i32) {
    %c0_i32 = arith.constant 0 : i32
    %c0_i32_0 = arith.constant 0 : i32
    %c0_i32_1 = arith.constant 0 : i32
    return %c0_i32, %c0_i32_0 : i32, i32
  }
  func.func @transform_2(%arg0: i32) -> (i32, i32) {
    %c0_i32 = arith.constant 0 : i32
    %c0_i32_0 = arith.constant 0 : i32
    %c0_i32_1 = arith.constant 0 : i32
    return %c0_i32, %c0_i32_0 : i32, i32
  }
  func.func @transform_3(%arg0: i32) -> (i32, i32, i32) {
    %c0_i32 = arith.constant 0 : i32
    %c0_i32_0 = arith.constant 0 : i32
    %c0_i32_1 = arith.constant 0 : i32
    %c0_i32_2 = arith.constant 0 : i32
    return %c0_i32, %c0_i32_0, %c0_i32_1 : i32, i32, i32
  }
  func.func @transform_4(%arg0: i32) -> (i32, i32) {
    %c0_i32 = arith.constant 0 : i32
    %c0_i32_0 = arith.constant 0 : i32
    %c0_i32_1 = arith.constant 0 : i32
    return %c0_i32, %c0_i32_0 : i32, i32
  }
  func.func @transform_5(%arg0: i32) -> (i32, i32) {
    %c0_i32 = arith.constant 0 : i32
    %c0_i32_0 = arith.constant 0 : i32
    %c0_i32_1 = arith.constant 0 : i32
    return %c0_i32, %c0_i32_0 : i32, i32
  }
  func.func @transform_6(%arg0: i32) -> (i32, i32) {
    %c0_i32 = arith.constant 0 : i32
    %c0_i32_0 = arith.constant 0 : i32
    %c0_i32_1 = arith.constant 0 : i32
    return %c0_i32, %c0_i32_0 : i32, i32
  }
  func.func @transform_7(%arg0: i32) -> (i32, i32) {
    %c0_i32 = arith.constant 0 : i32
    %c0_i32_0 = arith.constant 0 : i32
    return %arg0, %c0_i32 : i32, i32
  }
}

</mosaic_0001>

<llo_original>
// kernel: tpu_custom_call.1
$region0: #{tpu_custom_call.1}
  #allocation0 [shape = 'u32[]', space=smem, size = 0x4, offset = 0x4, fixed_abs, tag = 'smem constant byte address 0x4 - core index']
  #allocation1 [shape = 'u32[144,128]{1,0:T(1,128)}', space=vmem, size = 0x12000, scoped, tag = 'internal scratch']
  %s0 = inlined_call_operand.hbm [shape: f32[16,32], index: 0, kind: input, shape index: {}]
  %s1 = inlined_call_operand.hbm [shape: f32[32,128], index: 1, kind: input, shape index: {}]
  %s2 = inlined_call_operand.vmem [shape: f32[1,128], index: 2, kind: input, shape index: {}]
  %s3 = inlined_call_operand.hbm [shape: f32[2,128,128], index: 3, kind: input, shape index: {}]
  %s4 = inlined_call_operand.vmem [shape: f32[2,128], index: 4, kind: input, shape index: {}]
  %s5 = inlined_call_operand.hbm [shape: f32[128,128], index: 5, kind: input, shape index: {}]
  %s6 = inlined_call_operand.vmem [shape: f32[1,128], index: 6, kind: input, shape index: {}]
  %s7 = inlined_call_operand.hbm [shape: f32[16,128], index: 7, kind: output, shape index: {}]
  %s8 = sld [smem:[#allocation0]]
  $region54: #{tpu_custom_call.1} parent=0
    _
  %s10 = ssub.s32 1, %s8
  %s11 = scalar_select 0, %s10, %s8
  $region1: #{tpu_custom_call.1} parent=0
    #allocation2 [shape = 'u8[8192]{0}', space=vmem, size = 0x2000, scoped, tag = 'input window, operand 0, single buffered']
    #allocation3 [shape = 's32[1]{0}', space=sflag, size = 0x4, scoped, tag = 'scoped memory for tpu_custom_call.1']
    #allocation4 [shape = 's32[1]{0}', space=sflag, size = 0x4, scoped, tag = 'scoped memory for tpu_custom_call.1']
    #allocation5 [shape = 'u8[16384]{0}', space=vmem, size = 0x4000, scoped, tag = 'input window, operand 1, single buffered']
    #allocation6 [shape = 's32[1]{0}', space=sflag, size = 0x4, scoped, tag = 'scoped memory for tpu_custom_call.1']
    #allocation7 [shape = 'u8[131072]{0}', space=vmem, size = 0x20000, scoped, tag = 'input window, operand 3, single buffered']
    #allocation8 [shape = 'u8[65536]{0}', space=vmem, size = 0x10000, scoped, tag = 'input window, operand 5, single buffered']
    #allocation9 [shape = 's32[1]{0}', space=sflag, size = 0x4, scoped, tag = 'scoped memory for tpu_custom_call.1']
    #allocation10 [shape = 'u8[8192]{0}', space=vmem, size = 0x2000, scoped, tag = 'output window, operand 0, single buffered']
    %12 = vsyncpa [#allocation3], 0
    %13 = vsyncpa [#allocation6], 0
    %14 = vsyncpa [#allocation9], 0
    %15 = vsyncpa [#allocation4], 0
    // Predicated region
    $region2: #{tpu_custom_call.1} parent=1 // pred_check
      _
    $region3: #{tpu_custom_call.1} parent=1 // pred_check_branch
      %17 = sbr.rel (0) target = $region5
    $region4: #{tpu_custom_call.1} parent=1 // pred_region
      %s19 = ssub.s32 256, 256
      %20 = vsyncadd [#allocation3], %s19
      %s21 = sshll.u32 [#allocation2], 4
      %s22 = int_to_ptr.vmem [resolvable:$true] %s21
      %27 = dma.hbm_to_vmem [thread:$0]  %s0, 256, %s22, [#allocation3], 128, 128, 8
    $region5: #{tpu_custom_call.1} parent=1 // pred_fallthru
      _
    // Predicated region
    $region6: #{tpu_custom_call.1} parent=1 // pred_check
      _
    $region7: #{tpu_custom_call.1} parent=1 // pred_check_branch
      %29 = sbr.rel (0) target = $region9
    $region8: #{tpu_custom_call.1} parent=1 // pred_region
      %s31 = ssub.s32 512, 512
      %32 = vsyncadd [#allocation6], %s31
      %s33 = sshll.u32 [#allocation5], 4
      %s34 = int_to_ptr.vmem [resolvable:$true] %s33
      %39 = dma.hbm_to_vmem [thread:$0]  %s1, 512, %s34, [#allocation6], 128, 128, 8
    $region9: #{tpu_custom_call.1} parent=1 // pred_fallthru
      _
    // Predicated region
    $region10: #{tpu_custom_call.1} parent=1 // pred_check
      _
    $region11: #{tpu_custom_call.1} parent=1 // pred_check_branch
      %41 = sbr.rel (0) target = $region13
    $region12: #{tpu_custom_call.1} parent=1 // pred_region
      _
    $region13: #{tpu_custom_call.1} parent=1 // pred_fallthru
      _
    // Predicated region
    $region14: #{tpu_custom_call.1} parent=1 // pred_check
      _
    $region15: #{tpu_custom_call.1} parent=1 // pred_check_branch
      %43 = sbr.rel (0) target = $region17
    $region16: #{tpu_custom_call.1} parent=1 // pred_region
      %s45 = ssub.s32 4096, 4096
      %46 = vsyncadd [#allocation6], %s45
      %s47 = sshll.u32 [#allocation7], 4
      %s48 = int_to_ptr.vmem [resolvable:$true] %s47
      %53 = dma.hbm_to_vmem [thread:$0]  %s3, 4096, %s48, [#allocation6], 128, 128, 8
    $region17: #{tpu_custom_call.1} parent=1 // pred_fallthru
      _
    // Predicated region
    $region18: #{tpu_custom_call.1} parent=1 // pred_check
      _
    $region19: #{tpu_custom_call.1} parent=1 // pred_check_branch
      %55 = sbr.rel (0) target = $region21
    $region20: #{tpu_custom_call.1} parent=1 // pred_region
      _
    $region21: #{tpu_custom_call.1} parent=1 // pred_fallthru
      _
    // Predicated region
    $region22: #{tpu_custom_call.1} parent=1 // pred_check
      _
    $region23: #{tpu_custom_call.1} parent=1 // pred_check_branch
      %57 = sbr.rel (0) target = $region25
    $region24: #{tpu_custom_call.1} parent=1 // pred_region
      %s59 = ssub.s32 2048, 2048
      %60 = vsyncadd [#allocation9], %s59
      %s61 = sshll.u32 [#allocation8], 4
      %s62 = int_to_ptr.vmem [resolvable:$true] %s61
      %67 = dma.hbm_to_vmem [thread:$0]  %s5, 2048, %s62, [#allocation9], 128, 128, 8
    $region25: #{tpu_custom_call.1} parent=1 // pred_fallthru
      _
    // Predicated region
    $region26: #{tpu_custom_call.1} parent=1 // pred_check
      _
    $region27: #{tpu_custom_call.1} parent=1 // pred_check_branch
      %69 = sbr.rel (0) target = $region29
    $region28: #{tpu_custom_call.1} parent=1 // pred_region
      _
    $region29: #{tpu_custom_call.1} parent=1 // pred_fallthru
      _
    // Predicated region
    $region30: #{tpu_custom_call.1} parent=1 // pred_check
      _
    $region31: #{tpu_custom_call.1} parent=1 // pred_check_branch
      %71 = sbr.rel (0) target = $region33
    $region32: #{tpu_custom_call.1} parent=1 // pred_region
      %72 = dma.done [#allocation3], 256
    $region33: #{tpu_custom_call.1} parent=1 // pred_fallthru
      _
    // Predicated region
    $region34: #{tpu_custom_call.1} parent=1 // pred_check
      _
    $region35: #{tpu_custom_call.1} parent=1 // pred_check_branch
      %74 = sbr.rel (0) target = $region37
    $region36: #{tpu_custom_call.1} parent=1 // pred_region
      %75 = dma.done [#allocation6], 512
    $region37: #{tpu_custom_call.1} parent=1 // pred_fallthru
      _
    // Predicated region
    $region38: #{tpu_custom_call.1} parent=1 // pred_check
      _
    $region39: #{tpu_custom_call.1} parent=1 // pred_check_branch
      %77 = sbr.rel (0) target = $region41
    $region40: #{tpu_custom_call.1} parent=1 // pred_region
      %78 = dma.done [#allocation6], 4096
    $region41: #{tpu_custom_call.1} parent=1 // pred_fallthru
      _
    // Predicated region
    $region42: #{tpu_custom_call.1} parent=1 // pred_check
      _
    $region43: #{tpu_custom_call.1} parent=1 // pred_check_branch
      %80 = sbr.rel (0) target = $region45
    $region44: #{tpu_custom_call.1} parent=1 // pred_region
      %81 = dma.done [#allocation9], 2048
    $region45: #{tpu_custom_call.1} parent=1 // pred_fallthru
      _
    %v82 = vld [vmem:[#allocation2] sm:$0xff]
    %v83 = vld [vmem:[#allocation2 + $0x8] sm:$0xff]
    %v84 = vld [vmem:[#allocation5] sm:$0xff]
    %v85 = vld [vmem:[#allocation5 + $0x8] sm:$0xff]
    %v86 = vld [vmem:[#allocation5 + $0x10] sm:$0xff]
    %v87 = vld [vmem:[#allocation5 + $0x18] sm:$0xff]
    %v88 = vld [vmem:[%s2] sm:$0x1]
    %v90 = vlaneseq
    %v91 = vshrl.u32 %v90, 7
    %v92 = vsub.s32 0, %v91
    %v93 = vrot.slane %v88, %v92
    %vm95 = vcmask 261120
    %v97 = vsel %vm95, %v82, 0
    %v100 = vsel %vm95, %v83, 0
    %102 = vmatprep.subr.mxu0 0.0
    %103 = vmatpush1.msra.mxu0 %v84
    %104 = vmatprep.subr.mxu0 0.0
    %105 = vmatpush1.msra.mxu0 %v85
    %106 = vmatprep.subr.mxu0 0.0
    %107 = vmatpush1.msra.mxu0 %v86
    %108 = vmatprep.subr.mxu0 0.0
    %109 = vmatpush1.msra.mxu0 %v87
    %110 = vmatprep.subr.mxu0 0.0
    %111 = vmatpush1.msra.mxu0 0.0
    %112 = vmatprep.subr.mxu0 0.0
    %113 = vmatpush1.msra.mxu0 0.0
    %114 = vmatprep.subr.mxu0 0.0
    %115 = vmatpush1.msra.mxu0 0.0
    %116 = vmatprep.subr.mxu0 0.0
    %117 = vmatpush1.msra.mxu0 0.0
    %118 = vmatprep.subr.mxu0 0.0
    %119 = vmatpush1.msra.mxu0 0.0
    %120 = vmatprep.subr.mxu0 0.0
    %121 = vmatpush1.msra.mxu0 0.0
    %122 = vmatprep.subr.mxu0 0.0
    %123 = vmatpush1.msra.mxu0 0.0
    %124 = vmatprep.subr.mxu0 0.0
    %125 = vmatpush1.msra.mxu0 0.0
    %126 = vmatprep.subr.mxu0 0.0
    %127 = vmatpush1.msra.mxu0 0.0
    %128 = vmatprep.subr.mxu0 0.0
    %129 = vmatpush1.msra.mxu0 0.0
    %130 = vmatprep.subr.mxu0 0.0
    %131 = vmatpush1.msra.mxu0 0.0
    %132 = vmatprep.subr.mxu0 0.0
    %133 = vmatpush1.msra.mxu0 0.0
    %134 = vmatprep.subr.mxu0 0.0
    %135 = vmatpush1.msra.mxu0 0.0
    %136 = vmatprep.subr.mxu0 0.0
    %137 = vmatpush1.msra.mxu0 0.0
    %138 = vmatprep.subr.mxu0 0.0
    %139 = vmatpush1.msra.mxu0 0.0
    %140 = vmatprep.subr.mxu0 0.0
    %141 = vmatpush1.msra.mxu0 0.0
    %142 = vmatprep.subr.mxu0 0.0
    %143 = vmatpush1.msra.mxu0 0.0
    %144 = vmatprep.subr.mxu0 0.0
    %145 = vmatpush1.msra.mxu0 0.0
    %146 = vmatprep.subr.mxu0 0.0
    %147 = vmatpush1.msra.mxu0 0.0
    %148 = vmatprep.subr.mxu0 0.0
    %149 = vmatpush1.msra.mxu0 0.0
    %150 = vmatprep.subr.mxu0 0.0
    %151 = vmatpush1.msra.mxu0 0.0
    %152 = vmatprep.subr.mxu0 0.0
    %153 = vmatpush1.msra.mxu0 0.0
    %154 = vmatprep.subr.mxu0 0.0
    %155 = vmatpush1.msra.mxu0 0.0
    %156 = vmatprep.subr.mxu0 0.0
    %157 = vmatpush1.msra.mxu0 0.0
    %158 = vmatprep.subr.mxu0 0.0
    %159 = vmatpush1.msra.mxu0 0.0
    %160 = vmatprep.subr.mxu0 0.0
    %161 = vmatpush1.msra.mxu0 0.0
    %162 = vmatprep.subr.mxu0 0.0
    %163 = vmatpush1.msra.mxu0 0.0
    %164 = vmatprep.subr.mxu0 0.0
    %165 = vmatpush1.msra.mxu0 0.0
    %166 = vmatprep.mubr.f32.mxu0 0.0
    %167 = vmatmul.mubr.f32.gmra.mrb[0].mxu0 %v97
    %v168 = vpop.f32.mrb[0].mxu0
    %v169 = vadd.f32 %v93, %v168
    %v170 = vpop.f32.mrb[0].mxu0
    %171 = vmatprep.mubr.f32.mxu0 0.0
    %172 = vmatmul.mubr.f32.gmra.mrb[0].mxu0 %v100
    %v173 = vpop.f32.mrb[0].mxu0
    %v174 = vadd.f32 %v93, %v173
    %v175 = vpop.f32.mrb[0].mxu0
    %176 = vdwg.mxu0
    %v177 = vmax.f32 %v169, 0.0
    %v178 = vmax.f32 %v174, 0.0
    %v179 = vld [vmem:[%s4] sm:$0x3]
    %v180 = vld [vmem:[#allocation7] sm:$0xff]
    %v181 = vld [vmem:[#allocation7 + $0x8] sm:$0xff]
    %v182 = vld [vmem:[#allocation7 + $0x10] sm:$0xff]
    %v183 = vld [vmem:[#allocation7 + $0x18] sm:$0xff]
    %v184 = vld [vmem:[#allocation7 + $0x20] sm:$0xff]
    %v185 = vld [vmem:[#allocation7 + $0x28] sm:$0xff]
    %v186 = vld [vmem:[#allocation7 + $0x30] sm:$0xff]
    %v187 = vld [vmem:[#allocation7 + $0x38] sm:$0xff]
    %v188 = vld [vmem:[#allocation7 + $0x40] sm:$0xff]
    %v189 = vld [vmem:[#allocation7 + $0x48] sm:$0xff]
    %v190 = vld [vmem:[#allocation7 + $0x50] sm:$0xff]
    %v191 = vld [vmem:[#allocation7 + $0x58] sm:$0xff]
    %v192 = vld [vmem:[#allocation7 + $0x60] sm:$0xff]
    %v193 = vld [vmem:[#allocation7 + $0x68] sm:$0xff]
    %v194 = vld [vmem:[#allocation7 + $0x70] sm:$0xff]
    %v195 = vld [vmem:[#allocation7 + $0x78] sm:$0xff]
    %v196 = vlaneseq
    %v197 = vshrl.u32 %v196, 7
    %v198 = vsub.s32 0, %v197
    %v199 = vrot.slane %v179, %v198
    %200 = vmatprep.subr.mxu0 0.0
    %201 = vmatpush1.msra.mxu0 %v180
    %202 = vmatprep.subr.mxu0 0.0
    %203 = vmatpush1.msra.mxu0 %v181
    %204 = vmatprep.subr.mxu0 0.0
    %205 = vmatpush1.msra.mxu0 %v182
    %206 = vmatprep.subr.mxu0 0.0
    %207 = vmatpush1.msra.mxu0 %v183
    %208 = vmatprep.subr.mxu0 0.0
    %209 = vmatpush1.msra.mxu0 %v184
    %210 = vmatprep.subr.mxu0 0.0
    %211 = vmatpush1.msra.mxu0 %v185
    %212 = vmatprep.subr.mxu0 0.0
    %213 = vmatpush1.msra.mxu0 %v186
    %214 = vmatprep.subr.mxu0 0.0
    %215 = vmatpush1.msra.mxu0 %v187
    %216 = vmatprep.subr.mxu0 0.0
    %217 = vmatpush1.msra.mxu0 %v188
    %218 = vmatprep.subr.mxu0 0.0
    %219 = vmatpush1.msra.mxu0 %v189
    %220 = vmatprep.subr.mxu0 0.0
    %221 = vmatpush1.msra.mxu0 %v190
    %222 = vmatprep.subr.mxu0 0.0
    %223 = vmatpush1.msra.mxu0 %v191
    %224 = vmatprep.subr.mxu0 0.0
    %225 = vmatpush1.msra.mxu0 %v192
    %226 = vmatprep.subr.mxu0 0.0
    %227 = vmatpush1.msra.mxu0 %v193
    %228 = vmatprep.subr.mxu0 0.0
    %229 = vmatpush1.msra.mxu0 %v194
    %230 = vmatprep.subr.mxu0 0.0
    %231 = vmatpush1.msra.mxu0 %v195
    %232 = vmatprep.subr.mxu0 0.0
    %233 = vmatpush1.msra.mxu0 0.0
    %234 = vmatprep.subr.mxu0 0.0
    %235 = vmatpush1.msra.mxu0 0.0
    %236 = vmatprep.subr.mxu0 0.0
    %237 = vmatpush1.msra.mxu0 0.0
    %238 = vmatprep.subr.mxu0 0.0
    %239 = vmatpush1.msra.mxu0 0.0
    %240 = vmatprep.subr.mxu0 0.0
    %241 = vmatpush1.msra.mxu0 0.0
    %242 = vmatprep.subr.mxu0 0.0
    %243 = vmatpush1.msra.mxu0 0.0
    %244 = vmatprep.subr.mxu0 0.0
    %245 = vmatpush1.msra.mxu0 0.0
    %246 = vmatprep.subr.mxu0 0.0
    %247 = vmatpush1.msra.mxu0 0.0
    %248 = vmatprep.subr.mxu0 0.0
    %249 = vmatpush1.msra.mxu0 0.0
    %250 = vmatprep.subr.mxu0 0.0
    %251 = vmatpush1.msra.mxu0 0.0
    %252 = vmatprep.subr.mxu0 0.0
    %253 = vmatpush1.msra.mxu0 0.0
    %254 = vmatprep.subr.mxu0 0.0
    %255 = vmatpush1.msra.mxu0 0.0
    %256 = vmatprep.subr.mxu0 0.0
    %257 = vmatpush1.msra.mxu0 0.0
    %258 = vmatprep.subr.mxu0 0.0
    %259 = vmatpush1.msra.mxu0 0.0
    %260 = vmatprep.subr.mxu0 0.0
    %261 = vmatpush1.msra.mxu0 0.0
    %262 = vmatprep.subr.mxu0 0.0
    %263 = vmatpush1.msra.mxu0 0.0
    %264 = vmatprep.mubr.f32.mxu0 0.0
    %265 = vmatmul.mubr.f32.gmra.mrb[0].mxu0 %v177
    %v266 = vpop.f32.mrb[0].mxu0
    %v267 = vadd.f32 %v199, %v266
    %v268 = vpop.f32.mrb[0].mxu0
    %269 = vmatprep.mubr.f32.mxu0 0.0
    %270 = vmatmul.mubr.f32.gmra.mrb[0].mxu0 %v178
    %v271 = vpop.f32.mrb[0].mxu0
    %v272 = vadd.f32 %v199, %v271
    %v273 = vpop.f32.mrb[0].mxu0
    %274 = vdwg.mxu0
    %v275 = vmax.f32 %v267, 0.0
    %v276 = vmax.f32 %v272, 0.0
    %s277 = scalar_lea.vmem [#allocation7], 128
    %v278 = vld [vmem:[%s277] sm:$0xff]
    %v279 = vld [vmem:[%s277 + $0x8] sm:$0xff]
    %v280 = vld [vmem:[%s277 + $0x10] sm:$0xff]
    %v281 = vld [vmem:[%s277 + $0x18] sm:$0xff]
    %v282 = vld [vmem:[%s277 + $0x20] sm:$0xff]
    %v283 = vld [vmem:[%s277 + $0x28] sm:$0xff]
    %v284 = vld [vmem:[%s277 + $0x30] sm:$0xff]
    %v285 = vld [vmem:[%s277 + $0x38] sm:$0xff]
    %v286 = vld [vmem:[%s277 + $0x40] sm:$0xff]
    %v287 = vld [vmem:[%s277 + $0x48] sm:$0xff]
    %v288 = vld [vmem:[%s277 + $0x50] sm:$0xff]
    %v289 = vld [vmem:[%s277 + $0x58] sm:$0xff]
    %v290 = vld [vmem:[%s277 + $0x60] sm:$0xff]
    %v291 = vld [vmem:[%s277 + $0x68] sm:$0xff]
    %v292 = vld [vmem:[%s277 + $0x70] sm:$0xff]
    %v293 = vld [vmem:[%s277 + $0x78] sm:$0xff]
    %v294 = vlaneseq
    %v295 = vshrl.u32 %v294, 7
    %v296 = vsub.s32 1, %v295
    %v297 = vrot.slane %v179, %v296
    %298 = vmatprep.subr.mxu0 0.0
    %299 = vmatpush1.msra.mxu0 %v278
    %300 = vmatprep.subr.mxu0 0.0
    %301 = vmatpush1.msra.mxu0 %v279
    %302 = vmatprep.subr.mxu0 0.0
    %303 = vmatpush1.msra.mxu0 %v280
    %304 = vmatprep.subr.mxu0 0.0
    %305 = vmatpush1.msra.mxu0 %v281
    %306 = vmatprep.subr.mxu0 0.0
    %307 = vmatpush1.msra.mxu0 %v282
    %308 = vmatprep.subr.mxu0 0.0
    %309 = vmatpush1.msra.mxu0 %v283
    %310 = vmatprep.subr.mxu0 0.0
    %311 = vmatpush1.msra.mxu0 %v284
    %312 = vmatprep.subr.mxu0 0.0
    %313 = vmatpush1.msra.mxu0 %v285
    %314 = vmatprep.subr.mxu0 0.0
    %315 = vmatpush1.msra.mxu0 %v286
    %316 = vmatprep.subr.mxu0 0.0
    %317 = vmatpush1.msra.mxu0 %v287
    %318 = vmatprep.subr.mxu0 0.0
    %319 = vmatpush1.msra.mxu0 %v288
    %320 = vmatprep.subr.mxu0 0.0
    %321 = vmatpush1.msra.mxu0 %v289
    %322 = vmatprep.subr.mxu0 0.0
    %323 = vmatpush1.msra.mxu0 %v290
    %324 = vmatprep.subr.mxu0 0.0
    %325 = vmatpush1.msra.mxu0 %v291
    %326 = vmatprep.subr.mxu0 0.0
    %327 = vmatpush1.msra.mxu0 %v292
    %328 = vmatprep.subr.mxu0 0.0
    %329 = vmatpush1.msra.mxu0 %v293
    %330 = vmatprep.subr.mxu0 0.0
    %331 = vmatpush1.msra.mxu0 0.0
    %332 = vmatprep.subr.mxu0 0.0
    %333 = vmatpush1.msra.mxu0 0.0
    %334 = vmatprep.subr.mxu0 0.0
    %335 = vmatpush1.msra.mxu0 0.0
    %336 = vmatprep.subr.mxu0 0.0
    %337 = vmatpush1.msra.mxu0 0.0
    %338 = vmatprep.subr.mxu0 0.0
    %339 = vmatpush1.msra.mxu0 0.0
    %340 = vmatprep.subr.mxu0 0.0
    %341 = vmatpush1.msra.mxu0 0.0
    %342 = vmatprep.subr.mxu0 0.0
    %343 = vmatpush1.msra.mxu0 0.0
    %344 = vmatprep.subr.mxu0 0.0
    %345 = vmatpush1.msra.mxu0 0.0
    %346 = vmatprep.subr.mxu0 0.0
    %347 = vmatpush1.msra.mxu0 0.0
    %348 = vmatprep.subr.mxu0 0.0
    %349 = vmatpush1.msra.mxu0 0.0
    %350 = vmatprep.subr.mxu0 0.0
    %351 = vmatpush1.msra.mxu0 0.0
    %352 = vmatprep.subr.mxu0 0.0
    %353 = vmatpush1.msra.mxu0 0.0
    %354 = vmatprep.subr.mxu0 0.0
    %355 = vmatpush1.msra.mxu0 0.0
    %356 = vmatprep.subr.mxu0 0.0
    %357 = vmatpush1.msra.mxu0 0.0
    %358 = vmatprep.subr.mxu0 0.0
    %359 = vmatpush1.msra.mxu0 0.0
    %360 = vmatprep.subr.mxu0 0.0
    %361 = vmatpush1.msra.mxu0 0.0
    %362 = vmatprep.mubr.f32.mxu0 0.0
    %363 = vmatmul.mubr.f32.gmra.mrb[0].mxu0 %v275
    %v364 = vpop.f32.mrb[0].mxu0
    %v365 = vadd.f32 %v297, %v364
    %v366 = vpop.f32.mrb[0].mxu0
    %367 = vmatprep.mubr.f32.mxu0 0.0
    %368 = vmatmul.mubr.f32.gmra.mrb[0].mxu0 %v276
    %v369 = vpop.f32.mrb[0].mxu0
    %v370 = vadd.f32 %v297, %v369
    %v371 = vpop.f32.mrb[0].mxu0
    %372 = vdwg.mxu0
    %v373 = vmax.f32 %v365, 0.0
    %v374 = vmax.f32 %v370, 0.0
    %v375 = vld [vmem:[#allocation8] sm:$0xff]
    %v376 = vld [vmem:[#allocation8 + $0x8] sm:$0xff]
    %v377 = vld [vmem:[#allocation8 + $0x10] sm:$0xff]
    %v378 = vld [vmem:[#allocation8 + $0x18] sm:$0xff]
    %v379 = vld [vmem:[#allocation8 + $0x20] sm:$0xff]
    %v380 = vld [vmem:[#allocation8 + $0x28] sm:$0xff]
    %v381 = vld [vmem:[#allocation8 + $0x30] sm:$0xff]
    %v382 = vld [vmem:[#allocation8 + $0x38] sm:$0xff]
    %v383 = vld [vmem:[#allocation8 + $0x40] sm:$0xff]
    %v384 = vld [vmem:[#allocation8 + $0x48] sm:$0xff]
    %v385 = vld [vmem:[#allocation8 + $0x50] sm:$0xff]
    %v386 = vld [vmem:[#allocation8 + $0x58] sm:$0xff]
    %v387 = vld [vmem:[#allocation8 + $0x60] sm:$0xff]
    %v388 = vld [vmem:[#allocation8 + $0x68] sm:$0xff]
    %v389 = vld [vmem:[#allocation8 + $0x70] sm:$0xff]
    %v390 = vld [vmem:[#allocation8 + $0x78] sm:$0xff]
    %v391 = vld [vmem:[%s6] sm:$0x1]
    %v393 = vlaneseq
    %v394 = vshrl.u32 %v393, 7
    %v395 = vsub.s32 0, %v394
    %v396 = vrot.slane %v391, %v395
    %398 = vmatprep.subr.mxu0 0.0
    %399 = vmatpush1.msra.mxu0 %v375
    %400 = vmatprep.subr.mxu0 0.0
    %401 = vmatpush1.msra.mxu0 %v376
    %402 = vmatprep.subr.mxu0 0.0
    %403 = vmatpush1.msra.mxu0 %v377
    %404 = vmatprep.subr.mxu0 0.0
    %405 = vmatpush1.msra.mxu0 %v378
    %406 = vmatprep.subr.mxu0 0.0
    %407 = vmatpush1.msra.mxu0 %v379
    %408 = vmatprep.subr.mxu0 0.0
    %409 = vmatpush1.msra.mxu0 %v380
    %410 = vmatprep.subr.mxu0 0.0
    %411 = vmatpush1.msra.mxu0 %v381
    %412 = vmatprep.subr.mxu0 0.0
    %413 = vmatpush1.msra.mxu0 %v382
    %414 = vmatprep.subr.mxu0 0.0
    %415 = vmatpush1.msra.mxu0 %v383
    %416 = vmatprep.subr.mxu0 0.0
    %417 = vmatpush1.msra.mxu0 %v384
    %418 = vmatprep.subr.mxu0 0.0
    %419 = vmatpush1.msra.mxu0 %v385
    %420 = vmatprep.subr.mxu0 0.0
    %421 = vmatpush1.msra.mxu0 %v386
    %422 = vmatprep.subr.mxu0 0.0
    %423 = vmatpush1.msra.mxu0 %v387
    %424 = vmatprep.subr.mxu0 0.0
    %425 = vmatpush1.msra.mxu0 %v388
    %426 = vmatprep.subr.mxu0 0.0
    %427 = vmatpush1.msra.mxu0 %v389
    %428 = vmatprep.subr.mxu0 0.0
    %429 = vmatpush1.msra.mxu0 %v390
    %430 = vmatprep.subr.mxu0 0.0
    %431 = vmatpush1.msra.mxu0 0.0
    %432 = vmatprep.subr.mxu0 0.0
    %433 = vmatpush1.msra.mxu0 0.0
    %434 = vmatprep.subr.mxu0 0.0
    %435 = vmatpush1.msra.mxu0 0.0
    %436 = vmatprep.subr.mxu0 0.0
    %437 = vmatpush1.msra.mxu0 0.0
    %438 = vmatprep.subr.mxu0 0.0
    %439 = vmatpush1.msra.mxu0 0.0
    %440 = vmatprep.subr.mxu0 0.0
    %441 = vmatpush1.msra.mxu0 0.0
    %442 = vmatprep.subr.mxu0 0.0
    %443 = vmatpush1.msra.mxu0 0.0
    %444 = vmatprep.subr.mxu0 0.0
    %445 = vmatpush1.msra.mxu0 0.0
    %446 = vmatprep.subr.mxu0 0.0
    %447 = vmatpush1.msra.mxu0 0.0
    %448 = vmatprep.subr.mxu0 0.0
    %449 = vmatpush1.msra.mxu0 0.0
    %450 = vmatprep.subr.mxu0 0.0
    %451 = vmatpush1.msra.mxu0 0.0
    %452 = vmatprep.subr.mxu0 0.0
    %453 = vmatpush1.msra.mxu0 0.0
    %454 = vmatprep.subr.mxu0 0.0
    %455 = vmatpush1.msra.mxu0 0.0
    %456 = vmatprep.subr.mxu0 0.0
    %457 = vmatpush1.msra.mxu0 0.0
    %458 = vmatprep.subr.mxu0 0.0
    %459 = vmatpush1.msra.mxu0 0.0
    %460 = vmatprep.subr.mxu0 0.0
    %461 = vmatpush1.msra.mxu0 0.0
    %462 = vmatprep.mubr.f32.mxu0 0.0
    %463 = vmatmul.mubr.f32.gmra.mrb[0].mxu0 %v373
    %v464 = vpop.f32.mrb[0].mxu0
    %v465 = vadd.f32 %v396, %v464
    %v466 = vpop.f32.mrb[0].mxu0
    %467 = vmatprep.mubr.f32.mxu0 0.0
    %468 = vmatmul.mubr.f32.gmra.mrb[0].mxu0 %v374
    %v469 = vpop.f32.mrb[0].mxu0
    %v470 = vadd.f32 %v396, %v469
    %v471 = vpop.f32.mrb[0].mxu0
    %472 = vdwg.mxu0
    %v473 = vtanh.pop %v465
    %v474 = vtanh.pop %v470
    %475 = vst [vmem:[#allocation10] sm:$0xff] %v473
    %476 = vst [vmem:[#allocation10 + $0x8] sm:$0xff] %v474
    // Predicated region
    $region46: #{tpu_custom_call.1} parent=1 // pred_check
      _
    $region47: #{tpu_custom_call.1} parent=1 // pred_check_branch
      %478 = sbr.rel (0) target = $region49
    $region48: #{tpu_custom_call.1} parent=1 // pred_region
      %s480 = ssub.s32 256, 256
      %481 = vsyncadd [#allocation4], %s480
      %s482 = sshll.u32 [#allocation10], 4
      %s483 = int_to_ptr.vmem [resolvable:$true] %s482
      %488 = dma.vmem_to_hbm [thread:$0]  %s483, 256, %s7, [#allocation4], 128, 128, 8
    $region49: #{tpu_custom_call.1} parent=1 // pred_fallthru
      _
    // Predicated region
    $region50: #{tpu_custom_call.1} parent=1 // pred_check
      _
    $region51: #{tpu_custom_call.1} parent=1 // pred_check_branch
      %490 = sbr.rel (0) target = $region53
    $region52: #{tpu_custom_call.1} parent=1 // pred_region
      %491 = dma.done [#allocation4], 256
    $region53: #{tpu_custom_call.1} parent=1 // pred_fallthru
      _
    %492 = vsyncpa [#allocation3], 1
    %493 = vsyncpa [#allocation6], 1
    %494 = vsyncpa [#allocation9], 1
    %495 = vsyncpa [#allocation4], 1

</llo_original>
